<compile_context>
chip_gen: v7x
topology: tpu7x:2x2x1
jax: 0.10.0
libtpu: 0.0.40
codegen_flags: <defaults>
</compile_context>

<pallas_src>
import jax
import jax.numpy as jnp
from jax.experimental import pallas as pl
from jax.experimental.pallas import tpu as pltpu

D_IN = 784
D_HID = 200
D_OUT = 1
LN_EPS = 1e-5            # PyTorch nn.LayerNorm default
LRELU_SLOPE = 0.02
_SUB = 16                # sublane granularity covering bf16 packing (16) and f32 (8)


def _round_up(n, m):
    return ((n + m - 1) // m) * m


def _cdiv(a, b):
    return (a + b - 1) // b


def discriminator_kernel(x_ref, w1_ref, b1_ref, gw2_ref, c_ref, out_ref):
    # ---- Linear(784, 200): bf16 operands on the MXU, f32 accumulation ----
    h = jnp.dot(x_ref[...], w1_ref[...], preferred_element_type=jnp.float32)
    h = h + b1_ref[...]                                   # (TB, 200) f32 + (1, 200)

    # ---- LeakyReLU(0.02): max(h, a*h) is exact for slope in (0, 1) ----
    h = jnp.maximum(h, LRELU_SLOPE * h)

    # ---- Fused LayerNorm(200) + Linear(200, 1): hn never materialized ----
    #   hn    = (h - mean) * inv_std * gamma + beta
    #   logit = sum(hn * w2) + b2
    #         = inv_std * (sum(h * (gamma*w2)) - mean * sum(gamma*w2)) + sum(beta*w2) + b2
    # Three lane reductions (XLU) + per-row scalar VPU ops; one-pass (sum, sum-sq)
    # statistics with a clamped biased variance.
    inv_n = 1.0 / D_HID
    s = jnp.sum(h, axis=-1, keepdims=True)                # (TB, 1)
    ss = jnp.sum(h * h, axis=-1, keepdims=True)           # (TB, 1)
    hw = jnp.sum(h * gw2_ref[...], axis=-1, keepdims=True)
    mean = s * inv_n
    var = jnp.maximum(ss * inv_n - mean * mean, 0.0)
    inv_std = jax.lax.rsqrt(var + LN_EPS)
    logit = inv_std * (hw - mean * c_ref[0]) + c_ref[1]

    # ---- Sigmoid ----
    out_ref[...] = jax.nn.sigmoid(logit)


def _vmem_budget_bytes(tb):
    """Explicit VMEM budget for the chosen batch tile (lane/sublane-padded sizes)."""
    lane_in = _round_up(D_IN, 128)                        # 784 -> 896
    lane_hid = _round_up(D_HID, 128)                      # 200 -> 256
    x_buf = tb * lane_in * 2                              # bf16 x tile
    w1_buf = _round_up(D_IN, _SUB) * lane_hid * 2         # bf16 w1 (resident)
    row_buf = 8 * lane_hid * 4                            # (1,200) f32 rows pad to (8,256)
    out_buf = tb * 128 * 4                                # (tb,1) f32 lane-pads to (tb,128)
    act = tb * lane_hid * 4                               # one (tb,200) f32 activation
    dma = 2 * (x_buf + w1_buf + 2 * row_buf + out_buf)    # double-buffered BlockSpec DMAs
    return dma + 4 * act + (4 << 20)                      # temporaries + headroom


def discriminator_forward(x, w1, b1, gamma, beta, w2, b2, *, block_b=2048):
    """Batch-tiled Pallas forward pass of the Discriminator."""
    x = jnp.asarray(x)
    B = x.shape[0]
    assert x.shape[1] == D_IN, x.shape
    if x.dtype != jnp.bfloat16:
        x = x.astype(jnp.bfloat16)                        # stream x in bf16

    # Parameter prep (accepts PyTorch-ish shapes).  w1 is cast once to bf16; the
    # LayerNorm + Linear(200,1) tail is folded into one f32 row + two scalars.
    w1 = jnp.asarray(w1, jnp.float32).reshape(D_IN, D_HID).astype(jnp.bfloat16)
    b1 = jnp.asarray(b1, jnp.float32).reshape(1, D_HID)
    gamma = jnp.asarray(gamma, jnp.float32).reshape(D_HID)
    beta = jnp.asarray(beta, jnp.float32).reshape(D_HID)
    w2f = jnp.asarray(w2, jnp.float32).reshape(D_HID)
    b2s = jnp.asarray(b2, jnp.float32).reshape(())
    gw2 = (gamma * w2f).reshape(1, D_HID)                            # gamma * w2
    c = jnp.stack([jnp.sum(gw2), jnp.sum(beta * w2f) + b2s]).astype(jnp.float32)

    # Batch tile: multiple of 16 (bf16 sublane pack), capped at block_b.  When the
    # batch is big enough, keep >= 2 tiles so the "parallel" grid axis can shard
    # across both TensorCores on v7x.
    tb = min(block_b, _round_up(B, _SUB))
    if B >= 2 * _SUB:
        tb = min(tb, _round_up(_cdiv(B, 2), _SUB))
    tb = max(_SUB, (tb // _SUB) * _SUB)
    nb = _cdiv(B, tb)
    b_pad = nb * tb
    if b_pad != B:
        x = jnp.pad(x, ((0, b_pad - B), (0, 0)))          # padded rows are zeros

    const = lambda i: (0, 0)    # parameters stay VMEM-resident across the batch grid

    out = pl.pallas_call(
        discriminator_kernel,
        out_shape=jax.ShapeDtypeStruct((b_pad, D_OUT), jnp.float32),
        grid=(nb,),
        in_specs=[
            pl.BlockSpec((tb, D_IN), lambda i: (i, 0)),            # x: streamed bf16 tile
            pl.BlockSpec((D_IN, D_HID), const),                    # w1 (bf16, resident)
            pl.BlockSpec((1, D_HID), const),                       # b1 (f32)
            pl.BlockSpec((1, D_HID), const),                       # gamma*w2 row (f32)
            pl.BlockSpec(memory_space=pltpu.MemorySpace.SMEM),     # (c1, c2) scalars
        ],
        out_specs=pl.BlockSpec((tb, D_OUT), lambda i: (i, 0)),
        compiler_params=pltpu.CompilerParams(
            dimension_semantics=("parallel",),                     # megacore-shard batch
            vmem_limit_bytes=int(min(max(_vmem_budget_bytes(tb), 16 << 20), 48 << 20)),
        ),
    )(x, w1, b1, gw2, c)
    return out[:B]


def reference_forward(x, w1, b1, gamma, beta, w2, b2, *, matmul_dtype=jnp.float32):
    """Pure-JAX reference (PyTorch semantics); matmul_dtype lets us emulate bf16 ops."""
    x = jnp.asarray(x, jnp.float32)
    w1 = jnp.asarray(w1, jnp.float32).reshape(D_IN, D_HID)
    h = jnp.dot(x.astype(matmul_dtype), w1.astype(matmul_dtype),
                preferred_element_type=jnp.float32) + jnp.reshape(b1, (1, D_HID))
    h = jnp.where(h > 0, h, LRELU_SLOPE * h)
    mean = jnp.mean(h, axis=-1, keepdims=True)
    var = jnp.mean((h - mean) ** 2, axis=-1, keepdims=True)
    hn = (h - mean) * jax.lax.rsqrt(var + LN_EPS) * jnp.reshape(gamma, (1, D_HID)) \
         + jnp.reshape(beta, (1, D_HID))
    return jax.nn.sigmoid(hn @ jnp.reshape(w2, (D_HID, D_OUT))
                          + jnp.reshape(b2, (1, D_OUT)))


if __name__ == "__main__":
    key = jax.random.PRNGKey(0)
    kx, kw1, kb1, kw2, kb2, kg, kbt, kx2 = jax.random.split(key, 8)

    # Deterministic synthetic parameters (roughly Kaiming-uniform scale).
    w1 = jax.random.uniform(kw1, (D_IN, D_HID), jnp.float32, -1.0, 1.0) / jnp.sqrt(D_IN)
    b1 = jax.random.uniform(kb1, (D_HID,), jnp.float32, -1.0, 1.0) / jnp.sqrt(D_IN)
    gamma = 1.0 + 0.01 * jax.random.normal(kg, (D_HID,), jnp.float32)
    beta = 0.01 * jax.random.normal(kbt, (D_HID,), jnp.float32)
    w2 = jax.random.uniform(kw2, (D_HID, D_OUT), jnp.float32, -1.0, 1.0) / jnp.sqrt(D_HID)
    b2 = jax.random.uniform(kb2, (D_OUT,), jnp.float32, -1.0, 1.0) / jnp.sqrt(D_HID)

    # Case 1: small batch (single tile).
    x_small = jax.random.normal(kx, (16, D_IN), dtype=jnp.float32)
    out_small = jax.block_until_ready(
        discriminator_forward(x_small, w1, b1, gamma, beta, w2, b2))
    assert out_small.shape == (16, D_OUT), out_small.shape
    ref_bf = reference_forward(x_small, w1, b1, gamma, beta, w2, b2,
                               matmul_dtype=jnp.bfloat16)
    ref_f32 = reference_forward(x_small, w1, b1, gamma, beta, w2, b2)
    assert jnp.allclose(out_small, ref_bf, atol=1e-3, rtol=1e-3)    # matches kernel dtype
    assert jnp.allclose(out_small, ref_f32, atol=2e-2, rtol=2e-2)   # close to f32 PyTorch

    # Case 2: batch not a multiple of the tile -> exercises grid + pad/slice path.
    x_big = jax.random.normal(kx2, (300, D_IN), dtype=jnp.float32)
    out_big = jax.block_until_ready(
        discriminator_forward(x_big, w1, b1, gamma, beta, w2, b2, block_b=128))
    assert out_big.shape == (300, D_OUT), out_big.shape
    ref_bf_b = reference_forward(x_big, w1, b1, gamma, beta, w2, b2,
                                 matmul_dtype=jnp.bfloat16)
    ref_f32_b = reference_forward(x_big, w1, b1, gamma, beta, w2, b2)
    assert jnp.allclose(out_big, ref_bf_b, atol=1e-3, rtol=1e-3)
    assert jnp.allclose(out_big, ref_f32_b, atol=2e-2, rtol=2e-2)

    print("KERNEL_OK")
</pallas_src>

<mosaic_0001>
module attributes {stable_mosaic.version = 11 : i64} {
  func.func @discriminator_kernel(%arg0: i32, %arg1: memref<16x784xbf16, #tpu.memory_space<vmem>>, %arg2: memref<784x200xbf16, #tpu.memory_space<vmem>>, %arg3: memref<1x200xf32, #tpu.memory_space<vmem>>, %arg4: memref<1x200xf32, #tpu.memory_space<vmem>>, %arg5: memref<2xf32, #tpu.memory_space<smem>>, %arg6: memref<16x1xf32, #tpu.memory_space<vmem>>) attributes {dimension_semantics = [#tpu.dimension_semantics<parallel>], iteration_bounds = array<i64: 1>, scalar_prefetch = 0 : i64, scratch_operands = 0 : i64, tpu.core_type = #tpu.core_type<tc>, window_params = [{transform_indices = @transform_0, window_bounds = array<i64: 16, 784>}, {pipeline_mode = #tpu.pipeline_mode<synchronous>, transform_indices = @transform_1, window_bounds = array<i64: 784, 200>}, {pipeline_mode = #tpu.pipeline_mode<synchronous>, transform_indices = @transform_2, window_bounds = array<i64: 1, 200>}, {pipeline_mode = #tpu.pipeline_mode<synchronous>, transform_indices = @transform_3, window_bounds = array<i64: 1, 200>}, {transform_indices = @transform_4, window_bounds = array<i64: 2>}, {transform_indices = @transform_5, window_bounds = array<i64: 16, 1>}]} {
    %c0 = arith.constant 0 : index
    %c0_0 = arith.constant 0 : index
    %0 = vector.load %arg1[%c0, %c0_0] : memref<16x784xbf16, #tpu.memory_space<vmem>>, vector<16x784xbf16>
    %c0_1 = arith.constant 0 : index
    %c0_2 = arith.constant 0 : index
    %1 = vector.load %arg2[%c0_1, %c0_2] : memref<784x200xbf16, #tpu.memory_space<vmem>>, vector<784x200xbf16>
    %cst = arith.constant dense<0.000000e+00> : vector<16x200xf32>
    %2 = tpu.matmul %0, %1, %cst {dimension_numbers = #tpu.dot_dimension_numbers<[1], [0], [0], [1], [0, 0, 1, 1], [], []>} : vector<16x784xbf16>, vector<784x200xbf16>, vector<16x200xf32> -> vector<16x200xf32>
    %c0_3 = arith.constant 0 : index
    %c0_4 = arith.constant 0 : index
    %3 = vector.load %arg3[%c0_3, %c0_4] : memref<1x200xf32, #tpu.memory_space<vmem>>, vector<1x200xf32>
    %4 = vector.broadcast %3 : vector<1x200xf32> to vector<16x200xf32>
    %5 = arith.addf %2, %4 : vector<16x200xf32>
    %cst_5 = arith.constant 2.000000e-02 : f32
    %6 = vector.broadcast %cst_5 : f32 to vector<16x200xf32>
    %7 = arith.mulf %6, %5 : vector<16x200xf32>
    %8 = arith.maximumf %5, %7 : vector<16x200xf32>
    %cst_6 = arith.constant dense<0.000000e+00> : vector<16xf32>
    %9 = vector.multi_reduction <add>, %8, %cst_6 [1] : vector<16x200xf32> to vector<16xf32>
    %10 = vector.shape_cast %9 : vector<16xf32> to vector<16x1xf32>
    %11 = arith.mulf %8, %8 : vector<16x200xf32>
    %cst_7 = arith.constant dense<0.000000e+00> : vector<16xf32>
    %12 = vector.multi_reduction <add>, %11, %cst_7 [1] : vector<16x200xf32> to vector<16xf32>
    %13 = vector.shape_cast %12 : vector<16xf32> to vector<16x1xf32>
    %c0_8 = arith.constant 0 : index
    %c0_9 = arith.constant 0 : index
    %14 = vector.load %arg4[%c0_8, %c0_9] : memref<1x200xf32, #tpu.memory_space<vmem>>, vector<1x200xf32>
    %15 = vector.broadcast %14 : vector<1x200xf32> to vector<16x200xf32>
    %16 = arith.mulf %8, %15 : vector<16x200xf32>
    %cst_10 = arith.constant dense<0.000000e+00> : vector<16xf32>
    %17 = vector.multi_reduction <add>, %16, %cst_10 [1] : vector<16x200xf32> to vector<16xf32>
    %18 = vector.shape_cast %17 : vector<16xf32> to vector<16x1xf32>
    %cst_11 = arith.constant 5.000000e-03 : f32
    %19 = vector.broadcast %cst_11 : f32 to vector<16x1xf32>
    %20 = arith.mulf %10, %19 : vector<16x1xf32>
    %cst_12 = arith.constant 5.000000e-03 : f32
    %21 = vector.broadcast %cst_12 : f32 to vector<16x1xf32>
    %22 = arith.mulf %13, %21 : vector<16x1xf32>
    %23 = arith.mulf %20, %20 : vector<16x1xf32>
    %24 = arith.subf %22, %23 : vector<16x1xf32>
    %cst_13 = arith.constant 0.000000e+00 : f32
    %25 = vector.broadcast %cst_13 : f32 to vector<16x1xf32>
    %26 = arith.maximumf %24, %25 : vector<16x1xf32>
    %cst_14 = arith.constant 9.99999974E-6 : f32
    %27 = vector.broadcast %cst_14 : f32 to vector<16x1xf32>
    %28 = arith.addf %26, %27 : vector<16x1xf32>
    %29 = math.rsqrt %28 : vector<16x1xf32>
    %c0_15 = arith.constant 0 : index
    %30 = memref.load %arg5[%c0_15] : memref<2xf32, #tpu.memory_space<smem>>
    %31 = vector.broadcast %30 : f32 to vector<16x1xf32>
    %32 = arith.mulf %20, %31 : vector<16x1xf32>
    %33 = arith.subf %18, %32 : vector<16x1xf32>
    %34 = arith.mulf %29, %33 : vector<16x1xf32>
    %c1 = arith.constant 1 : index
    %35 = memref.load %arg5[%c1] : memref<2xf32, #tpu.memory_space<smem>>
    %36 = vector.broadcast %35 : f32 to vector<16x1xf32>
    %37 = arith.addf %34, %36 : vector<16x1xf32>
    %38 = arith.negf %37 : vector<16x1xf32>
    %39 = math.exp %38 : vector<16x1xf32>
    %cst_16 = arith.constant 1.000000e+00 : f32
    %40 = vector.broadcast %cst_16 : f32 to vector<16x1xf32>
    %41 = arith.addf %40, %39 : vector<16x1xf32>
    %42 = arith.divf %40, %41 : vector<16x1xf32>
    %c0_17 = arith.constant 0 : index
    %c0_18 = arith.constant 0 : index
    %43 = vector.load %arg6[%c0_17, %c0_18] : memref<16x1xf32, #tpu.memory_space<vmem>>, vector<16x1xf32>
    tpu.vector_store %arg6[%c0_17, %c0_18], %42 {strides = array<i32>} : memref<16x1xf32, #tpu.memory_space<vmem>>, vector<16x1xf32>,
    return
  }
  func.func @transform_0(%arg0: i32) -> (i32, i32) {
    %c0_i32 = arith.constant 0 : i32
    %c0_i32_0 = arith.constant 0 : i32
    return %arg0, %c0_i32 : i32, i32
  }
  func.func @transform_1(%arg0: i32) -> (i32, i32) {
    %c0_i32 = arith.constant 0 : i32
    %c0_i32_0 = arith.constant 0 : i32
    %c0_i32_1 = arith.constant 0 : i32
    return %c0_i32, %c0_i32_0 : i32, i32
  }
  func.func @transform_2(%arg0: i32) -> (i32, i32) {
    %c0_i32 = arith.constant 0 : i32
    %c0_i32_0 = arith.constant 0 : i32
    %c0_i32_1 = arith.constant 0 : i32
    return %c0_i32, %c0_i32_0 : i32, i32
  }
  func.func @transform_3(%arg0: i32) -> (i32, i32) {
    %c0_i32 = arith.constant 0 : i32
    %c0_i32_0 = arith.constant 0 : i32
    %c0_i32_1 = arith.constant 0 : i32
    return %c0_i32, %c0_i32_0 : i32, i32
  }
  func.func @transform_4(%arg0: i32) -> i32 {
    %c0_i32 = arith.constant 0 : i32
    %c0_i32_0 = arith.constant 0 : i32
    return %c0_i32 : i32
  }
  func.func @transform_5(%arg0: i32) -> (i32, i32) {
    %c0_i32 = arith.constant 0 : i32
    %c0_i32_0 = arith.constant 0 : i32
    return %arg0, %c0_i32 : i32, i32
  }
}

</mosaic_0001>

<llo_original>
// kernel: tpu_custom_call.1
$region0: #{tpu_custom_call.1}
  #allocation0 [shape = 'u32[]', space=smem, size = 0x4, offset = 0x4, fixed_abs, tag = 'smem constant byte address 0x4 - core index']
  #allocation1 [shape = 'u32[144,128]{1,0:T(1,128)}', space=vmem, size = 0x12000, scoped, tag = 'internal scratch']
  %s0 = inlined_call_operand.vmem [shape: bf16[16,784], index: 0, kind: input, shape index: {}]
  %s1 = inlined_call_operand.vmem [shape: bf16[784,200], index: 1, kind: input, shape index: {}]
  %s2 = inlined_call_operand.vmem [shape: f32[1,200], index: 2, kind: input, shape index: {}]
  %s3 = inlined_call_operand.vmem [shape: f32[1,200], index: 3, kind: input, shape index: {}]
  %s4 = inlined_call_operand.vmem [shape: f32[2], index: 4, kind: input, shape index: {}]
  %s5 = inlined_call_operand.vmem [shape: f32[16,1], index: 5, kind: output, shape index: {}]
  %s6 = sld [smem:[#allocation0]]
  $region34: #{tpu_custom_call.1} parent=0
    _
  %s8 = ssub.s32 1, %s6
  %s9 = scalar_select 0, %s8, %s6
  $region1: #{tpu_custom_call.1} parent=0
    #allocation2 [shape = 'u8[512]{0}', space=smem, size = 0x200, scoped, tag = 'input window, operand 4, single buffered']
    #allocation3 [shape = 's32[1]{0}', space=sflag, size = 0x4, scoped, tag = 'scoped memory for tpu_custom_call.1']
    %10 = vsyncpa [#allocation3], 0
    // Predicated region
    $region2: #{tpu_custom_call.1} parent=1 // pred_check
      _
    $region3: #{tpu_custom_call.1} parent=1 // pred_check_branch
      %12 = sbr.rel (0) target = $region5
    $region4: #{tpu_custom_call.1} parent=1 // pred_region
      _
    $region5: #{tpu_custom_call.1} parent=1 // pred_fallthru
      _
    // Predicated region
    $region6: #{tpu_custom_call.1} parent=1 // pred_check
      _
    $region7: #{tpu_custom_call.1} parent=1 // pred_check_branch
      %14 = sbr.rel (0) target = $region9
    $region8: #{tpu_custom_call.1} parent=1 // pred_region
      _
    $region9: #{tpu_custom_call.1} parent=1 // pred_fallthru
      _
    // Predicated region
    $region10: #{tpu_custom_call.1} parent=1 // pred_check
      _
    $region11: #{tpu_custom_call.1} parent=1 // pred_check_branch
      %16 = sbr.rel (0) target = $region13
    $region12: #{tpu_custom_call.1} parent=1 // pred_region
      _
    $region13: #{tpu_custom_call.1} parent=1 // pred_fallthru
      _
    // Predicated region
    $region14: #{tpu_custom_call.1} parent=1 // pred_check
      _
    $region15: #{tpu_custom_call.1} parent=1 // pred_check_branch
      %18 = sbr.rel (0) target = $region17
    $region16: #{tpu_custom_call.1} parent=1 // pred_region
      _
    $region17: #{tpu_custom_call.1} parent=1 // pred_fallthru
      _
    // Predicated region
    $region18: #{tpu_custom_call.1} parent=1 // pred_check
      _
    $region19: #{tpu_custom_call.1} parent=1 // pred_check_branch
      %20 = sbr.rel (0) target = $region21
    $region20: #{tpu_custom_call.1} parent=1 // pred_region
      %s22 = ssub.s32 16, 16
      %23 = vsyncadd [#allocation3], %s22
      %s25 = sshll.u32 %s4, 4
      %s26 = int_to_ptr.vmem [resolvable:$true] %s25
      %28 = dma.vmem_to_smem %s26, 16, [#allocation2], [#allocation3]
    $region21: #{tpu_custom_call.1} parent=1 // pred_fallthru
      _
    // Predicated region
    $region22: #{tpu_custom_call.1} parent=1 // pred_check
      _
    $region23: #{tpu_custom_call.1} parent=1 // pred_check_branch
      %30 = sbr.rel (0) target = $region25
    $region24: #{tpu_custom_call.1} parent=1 // pred_region
      %31 = dma.done [#allocation3], 16
    $region25: #{tpu_custom_call.1} parent=1 // pred_fallthru
      _
    %32 = sfence
    %v34 = vld [vmem:[%s0] sm:$0xff]
    %v35 = vld [vmem:[%s0 + $0x8] sm:$0xff]
    %v36 = vld [vmem:[%s0 + $0x10] sm:$0xff]
    %v37 = vld [vmem:[%s0 + $0x18] sm:$0xf]
    %v38 = vld [vmem:[%s0 + $0x1c] sm:$0xff]
    %v39 = vld [vmem:[%s0 + $0x24] sm:$0xff]
    %v40 = vld [vmem:[%s0 + $0x2c] sm:$0xff]
    %v41 = vld [vmem:[%s0 + $0x34] sm:$0xf]
    %v42 = vld [vmem:[%s1] sm:$0xff]
    %v43 = vld [vmem:[%s1 + $0x8] sm:$0xff]
    %v44 = vld [vmem:[%s1 + $0x10] sm:$0xff]
    %v45 = vld [vmem:[%s1 + $0x18] sm:$0xff]
    %v46 = vld [vmem:[%s1 + $0x20] sm:$0xff]
    %v47 = vld [vmem:[%s1 + $0x28] sm:$0xff]
    %v48 = vld [vmem:[%s1 + $0x30] sm:$0xff]
    %v49 = vld [vmem:[%s1 + $0x38] sm:$0xff]
    %v50 = vld [vmem:[%s1 + $0x40] sm:$0xff]
    %v51 = vld [vmem:[%s1 + $0x48] sm:$0xff]
    %v52 = vld [vmem:[%s1 + $0x50] sm:$0xff]
    %v53 = vld [vmem:[%s1 + $0x58] sm:$0xff]
    %v54 = vld [vmem:[%s1 + $0x60] sm:$0xff]
    %v55 = vld [vmem:[%s1 + $0x68] sm:$0xff]
    %v56 = vld [vmem:[%s1 + $0x70] sm:$0xff]
    %v57 = vld [vmem:[%s1 + $0x78] sm:$0xff]
    %v58 = vld [vmem:[%s1 + $0x80] sm:$0xff]
    %v59 = vld [vmem:[%s1 + $0x88] sm:$0xff]
    %v60 = vld [vmem:[%s1 + $0x90] sm:$0xff]
    %v61 = vld [vmem:[%s1 + $0x98] sm:$0xff]
    %v62 = vld [vmem:[%s1 + $0xa0] sm:$0xff]
    %v63 = vld [vmem:[%s1 + $0xa8] sm:$0xff]
    %v64 = vld [vmem:[%s1 + $0xb0] sm:$0xff]
    %v65 = vld [vmem:[%s1 + $0xb8] sm:$0xff]
    %v66 = vld [vmem:[%s1 + $0xc0] sm:$0xff]
    %v67 = vld [vmem:[%s1 + $0xc8] sm:$0xff]
    %v68 = vld [vmem:[%s1 + $0xd0] sm:$0xff]
    %v69 = vld [vmem:[%s1 + $0xd8] sm:$0xff]
    %v70 = vld [vmem:[%s1 + $0xe0] sm:$0xff]
    %v71 = vld [vmem:[%s1 + $0xe8] sm:$0xff]
    %v72 = vld [vmem:[%s1 + $0xf0] sm:$0xff]
    %v73 = vld [vmem:[%s1 + $0xf8] sm:$0xff]
    %v74 = vld [vmem:[%s1 + $0x100] sm:$0xff]
    %v75 = vld [vmem:[%s1 + $0x108] sm:$0xff]
    %v76 = vld [vmem:[%s1 + $0x110] sm:$0xff]
    %v77 = vld [vmem:[%s1 + $0x118] sm:$0xff]
    %v78 = vld [vmem:[%s1 + $0x120] sm:$0xff]
    %v79 = vld [vmem:[%s1 + $0x128] sm:$0xff]
    %v80 = vld [vmem:[%s1 + $0x130] sm:$0xff]
    %v81 = vld [vmem:[%s1 + $0x138] sm:$0xff]
    %v82 = vld [vmem:[%s1 + $0x140] sm:$0xff]
    %v83 = vld [vmem:[%s1 + $0x148] sm:$0xff]
    %v84 = vld [vmem:[%s1 + $0x150] sm:$0xff]
    %v85 = vld [vmem:[%s1 + $0x158] sm:$0xff]
    %v86 = vld [vmem:[%s1 + $0x160] sm:$0xff]
    %v87 = vld [vmem:[%s1 + $0x168] sm:$0xff]
    %v88 = vld [vmem:[%s1 + $0x170] sm:$0xff]
    %v89 = vld [vmem:[%s1 + $0x178] sm:$0xff]
    %v90 = vld [vmem:[%s1 + $0x180] sm:$0xff]
    %v91 = vld [vmem:[%s1 + $0x188] sm:$0xff]
    %v92 = vld [vmem:[%s1 + $0x190] sm:$0xff]
    %v93 = vld [vmem:[%s1 + $0x198] sm:$0xff]
    %v94 = vld [vmem:[%s1 + $0x1a0] sm:$0xff]
    %v95 = vld [vmem:[%s1 + $0x1a8] sm:$0xff]
    %v96 = vld [vmem:[%s1 + $0x1b0] sm:$0xff]
    %v97 = vld [vmem:[%s1 + $0x1b8] sm:$0xff]
    %v98 = vld [vmem:[%s1 + $0x1c0] sm:$0xff]
    %v99 = vld [vmem:[%s1 + $0x1c8] sm:$0xff]
    %v100 = vld [vmem:[%s1 + $0x1d0] sm:$0xff]
    %v101 = vld [vmem:[%s1 + $0x1d8] sm:$0xff]
    %v102 = vld [vmem:[%s1 + $0x1e0] sm:$0xff]
    %v103 = vld [vmem:[%s1 + $0x1e8] sm:$0xff]
    %v104 = vld [vmem:[%s1 + $0x1f0] sm:$0xff]
    %v105 = vld [vmem:[%s1 + $0x1f8] sm:$0xff]
    %v106 = vld [vmem:[%s1 + $0x200] sm:$0xff]
    %v107 = vld [vmem:[%s1 + $0x208] sm:$0xff]
    %v108 = vld [vmem:[%s1 + $0x210] sm:$0xff]
    %v109 = vld [vmem:[%s1 + $0x218] sm:$0xff]
    %v110 = vld [vmem:[%s1 + $0x220] sm:$0xff]
    %v111 = vld [vmem:[%s1 + $0x228] sm:$0xff]
    %v112 = vld [vmem:[%s1 + $0x230] sm:$0xff]
    %v113 = vld [vmem:[%s1 + $0x238] sm:$0xff]
    %v114 = vld [vmem:[%s1 + $0x240] sm:$0xff]
    %v115 = vld [vmem:[%s1 + $0x248] sm:$0xff]
    %v116 = vld [vmem:[%s1 + $0x250] sm:$0xff]
    %v117 = vld [vmem:[%s1 + $0x258] sm:$0xff]
    %v118 = vld [vmem:[%s1 + $0x260] sm:$0xff]
    %v119 = vld [vmem:[%s1 + $0x268] sm:$0xff]
    %v120 = vld [vmem:[%s1 + $0x270] sm:$0xff]
    %v121 = vld [vmem:[%s1 + $0x278] sm:$0xff]
    %v122 = vld [vmem:[%s1 + $0x280] sm:$0xff]
    %v123 = vld [vmem:[%s1 + $0x288] sm:$0xff]
    %v124 = vld [vmem:[%s1 + $0x290] sm:$0xff]
    %v125 = vld [vmem:[%s1 + $0x298] sm:$0xff]
    %v126 = vld [vmem:[%s1 + $0x2a0] sm:$0xff]
    %v127 = vld [vmem:[%s1 + $0x2a8] sm:$0xff]
    %v128 = vld [vmem:[%s1 + $0x2b0] sm:$0xff]
    %v129 = vld [vmem:[%s1 + $0x2b8] sm:$0xff]
    %v130 = vld [vmem:[%s1 + $0x2c0] sm:$0xff]
    %v131 = vld [vmem:[%s1 + $0x2c8] sm:$0xff]
    %v132 = vld [vmem:[%s1 + $0x2d0] sm:$0xff]
    %v133 = vld [vmem:[%s1 + $0x2d8] sm:$0xff]
    %v134 = vld [vmem:[%s1 + $0x2e0] sm:$0xff]
    %v135 = vld [vmem:[%s1 + $0x2e8] sm:$0xff]
    %v136 = vld [vmem:[%s1 + $0x2f0] sm:$0xff]
    %v137 = vld [vmem:[%s1 + $0x2f8] sm:$0xff]
    %v138 = vld [vmem:[%s1 + $0x300] sm:$0xff]
    %v139 = vld [vmem:[%s1 + $0x308] sm:$0xff]
    %v140 = vld [vmem:[%s2] sm:$0x3]
    %v142 = vlaneseq
    %v143 = vshrl.u32 %v142, 7
    %v144 = vsub.s32 0, %v143
    %v145 = vrot.slane %v140, %v144
    %v146 = vlaneseq
    %v147 = vshrl.u32 %v146, 7
    %v148 = vsub.s32 1, %v147
    %v149 = vrot.slane %v140, %v148
    %v160 = vunpack.c.l.b16 %v34
    %v161 = vunpack.c.h.b16 %v34
    %v162 = vunpack.c.l.b16 %v35
    %v163 = vunpack.c.h.b16 %v35
    %v164 = vunpack.c.l.b16 %v36
    %v165 = vunpack.c.h.b16 %v36
    %v166 = vunpack.c.l.b16 %v37
    %v167 = vunpack.c.l.b16 %v38
    %v168 = vunpack.c.h.b16 %v38
    %v169 = vunpack.c.l.b16 %v39
    %v170 = vunpack.c.h.b16 %v39
    %v171 = vunpack.c.l.b16 %v40
    %v172 = vunpack.c.h.b16 %v40
    %v173 = vunpack.c.l.b16 %v41
    %v174 = vpack.c.b16 %v167, %v160
    %v175 = vpack.c.b16 %v168, %v161
    %v176 = vpack.c.b16 %v169, %v162
    %v177 = vpack.c.b16 %v170, %v163
    %v178 = vpack.c.b16 %v171, %v164
    %v179 = vpack.c.b16 %v172, %v165
    %v180 = vpack.c.b16 %v173, %v166
    %v285 = vunpack.c.l.b16 %v42
    %v286 = vunpack.c.h.b16 %v42
    %v287 = vunpack.c.l.b16 %v43
    %v288 = vunpack.c.h.b16 %v43
    %v289 = vunpack.c.l.b16 %v44
    %v290 = vunpack.c.h.b16 %v44
    %v291 = vunpack.c.l.b16 %v45
    %v292 = vunpack.c.h.b16 %v45
    %v293 = vunpack.c.l.b16 %v46
    %v294 = vunpack.c.h.b16 %v46
    %v295 = vunpack.c.l.b16 %v47
    %v296 = vunpack.c.h.b16 %v47
    %v297 = vunpack.c.l.b16 %v48
    %v298 = vunpack.c.h.b16 %v48
    %v299 = vunpack.c.l.b16 %v49
    %v300 = vunpack.c.h.b16 %v49
    %v301 = vunpack.c.l.b16 %v50
    %v302 = vunpack.c.h.b16 %v50
    %v303 = vunpack.c.l.b16 %v51
    %v304 = vunpack.c.h.b16 %v51
    %v305 = vunpack.c.l.b16 %v52
    %v306 = vunpack.c.h.b16 %v52
    %v307 = vunpack.c.l.b16 %v53
    %v308 = vunpack.c.h.b16 %v53
    %v309 = vunpack.c.l.b16 %v54
    %v310 = vunpack.c.h.b16 %v54
    %v311 = vunpack.c.l.b16 %v55
    %v312 = vunpack.c.h.b16 %v55
    %v313 = vunpack.c.l.b16 %v56
    %v314 = vunpack.c.h.b16 %v56
    %v315 = vunpack.c.l.b16 %v57
    %v316 = vunpack.c.h.b16 %v57
    %v317 = vunpack.c.l.b16 %v58
    %v318 = vunpack.c.h.b16 %v58
    %v319 = vunpack.c.l.b16 %v59
    %v320 = vunpack.c.h.b16 %v59
    %v321 = vunpack.c.l.b16 %v60
    %v322 = vunpack.c.h.b16 %v60
    %v323 = vunpack.c.l.b16 %v61
    %v324 = vunpack.c.h.b16 %v61
    %v325 = vunpack.c.l.b16 %v62
    %v326 = vunpack.c.h.b16 %v62
    %v327 = vunpack.c.l.b16 %v63
    %v328 = vunpack.c.h.b16 %v63
    %v329 = vunpack.c.l.b16 %v64
    %v330 = vunpack.c.h.b16 %v64
    %v331 = vunpack.c.l.b16 %v65
    %v332 = vunpack.c.h.b16 %v65
    %v333 = vunpack.c.l.b16 %v66
    %v334 = vunpack.c.h.b16 %v66
    %v335 = vunpack.c.l.b16 %v67
    %v336 = vunpack.c.h.b16 %v67
    %v337 = vunpack.c.l.b16 %v68
    %v338 = vunpack.c.h.b16 %v68
    %v339 = vunpack.c.l.b16 %v69
    %v340 = vunpack.c.h.b16 %v69
    %v341 = vunpack.c.l.b16 %v70
    %v342 = vunpack.c.h.b16 %v70
    %v343 = vunpack.c.l.b16 %v71
    %v344 = vunpack.c.h.b16 %v71
    %v345 = vunpack.c.l.b16 %v72
    %v346 = vunpack.c.h.b16 %v72
    %v347 = vunpack.c.l.b16 %v73
    %v348 = vunpack.c.h.b16 %v73
    %v349 = vunpack.c.l.b16 %v74
    %v350 = vunpack.c.h.b16 %v74
    %v351 = vunpack.c.l.b16 %v75
    %v352 = vunpack.c.h.b16 %v75
    %v353 = vunpack.c.l.b16 %v76
    %v354 = vunpack.c.h.b16 %v76
    %v355 = vunpack.c.l.b16 %v77
    %v356 = vunpack.c.h.b16 %v77
    %v357 = vunpack.c.l.b16 %v78
    %v358 = vunpack.c.h.b16 %v78
    %v359 = vunpack.c.l.b16 %v79
    %v360 = vunpack.c.h.b16 %v79
    %v361 = vunpack.c.l.b16 %v80
    %v362 = vunpack.c.h.b16 %v80
    %v363 = vunpack.c.l.b16 %v81
    %v364 = vunpack.c.h.b16 %v81
    %v365 = vunpack.c.l.b16 %v82
    %v366 = vunpack.c.h.b16 %v82
    %v367 = vunpack.c.l.b16 %v83
    %v368 = vunpack.c.h.b16 %v83
    %v369 = vunpack.c.l.b16 %v84
    %v370 = vunpack.c.h.b16 %v84
    %v371 = vunpack.c.l.b16 %v85
    %v372 = vunpack.c.h.b16 %v85
    %v373 = vunpack.c.l.b16 %v86
    %v374 = vunpack.c.h.b16 %v86
    %v375 = vunpack.c.l.b16 %v87
    %v376 = vunpack.c.h.b16 %v87
    %v377 = vunpack.c.l.b16 %v88
    %v378 = vunpack.c.h.b16 %v88
    %v379 = vunpack.c.l.b16 %v89
    %v380 = vunpack.c.h.b16 %v89
    %v381 = vunpack.c.l.b16 %v90
    %v382 = vunpack.c.h.b16 %v90
    %v383 = vunpack.c.l.b16 %v91
    %v384 = vunpack.c.h.b16 %v91
    %v385 = vunpack.c.l.b16 %v92
    %v386 = vunpack.c.h.b16 %v92
    %v387 = vunpack.c.l.b16 %v93
    %v388 = vunpack.c.h.b16 %v93
    %v389 = vunpack.c.l.b16 %v94
    %v390 = vunpack.c.h.b16 %v94
    %v391 = vunpack.c.l.b16 %v95
    %v392 = vunpack.c.h.b16 %v95
    %v393 = vunpack.c.l.b16 %v96
    %v394 = vunpack.c.h.b16 %v96
    %v395 = vunpack.c.l.b16 %v97
    %v396 = vunpack.c.h.b16 %v97
    %v397 = vunpack.c.l.b16 %v98
    %v398 = vunpack.c.h.b16 %v98
    %v399 = vunpack.c.l.b16 %v99
    %v400 = vunpack.c.h.b16 %v99
    %v401 = vunpack.c.l.b16 %v100
    %v402 = vunpack.c.h.b16 %v100
    %v403 = vunpack.c.l.b16 %v101
    %v404 = vunpack.c.h.b16 %v101
    %v405 = vunpack.c.l.b16 %v102
    %v406 = vunpack.c.h.b16 %v102
    %v407 = vunpack.c.l.b16 %v103
    %v408 = vunpack.c.h.b16 %v103
    %v409 = vunpack.c.l.b16 %v104
    %v410 = vunpack.c.h.b16 %v104
    %v411 = vunpack.c.l.b16 %v105
    %v412 = vunpack.c.h.b16 %v105
    %v413 = vunpack.c.l.b16 %v106
    %v414 = vunpack.c.h.b16 %v106
    %v415 = vunpack.c.l.b16 %v107
    %v416 = vunpack.c.h.b16 %v107
    %v417 = vunpack.c.l.b16 %v108
    %v418 = vunpack.c.h.b16 %v108
    %v419 = vunpack.c.l.b16 %v109
    %v420 = vunpack.c.h.b16 %v109
    %v421 = vunpack.c.l.b16 %v110
    %v422 = vunpack.c.h.b16 %v110
    %v423 = vunpack.c.l.b16 %v111
    %v424 = vunpack.c.h.b16 %v111
    %v425 = vunpack.c.l.b16 %v112
    %v426 = vunpack.c.h.b16 %v112
    %v427 = vunpack.c.l.b16 %v113
    %v428 = vunpack.c.h.b16 %v113
    %v429 = vunpack.c.l.b16 %v114
    %v430 = vunpack.c.h.b16 %v114
    %v431 = vunpack.c.l.b16 %v115
    %v432 = vunpack.c.h.b16 %v115
    %v433 = vunpack.c.l.b16 %v116
    %v434 = vunpack.c.h.b16 %v116
    %v435 = vunpack.c.l.b16 %v117
    %v436 = vunpack.c.h.b16 %v117
    %v437 = vunpack.c.l.b16 %v118
    %v438 = vunpack.c.h.b16 %v118
    %v439 = vunpack.c.l.b16 %v119
    %v440 = vunpack.c.h.b16 %v119
    %v441 = vunpack.c.l.b16 %v120
    %v442 = vunpack.c.h.b16 %v120
    %v443 = vunpack.c.l.b16 %v121
    %v444 = vunpack.c.h.b16 %v121
    %v445 = vunpack.c.l.b16 %v122
    %v446 = vunpack.c.h.b16 %v122
    %v447 = vunpack.c.l.b16 %v123
    %v448 = vunpack.c.h.b16 %v123
    %v449 = vunpack.c.l.b16 %v124
    %v450 = vunpack.c.h.b16 %v124
    %v451 = vunpack.c.l.b16 %v125
    %v452 = vunpack.c.h.b16 %v125
    %v453 = vunpack.c.l.b16 %v126
    %v454 = vunpack.c.h.b16 %v126
    %v455 = vunpack.c.l.b16 %v127
    %v456 = vunpack.c.h.b16 %v127
    %v457 = vunpack.c.l.b16 %v128
    %v458 = vunpack.c.h.b16 %v128
    %v459 = vunpack.c.l.b16 %v129
    %v460 = vunpack.c.h.b16 %v129
    %v461 = vunpack.c.l.b16 %v130
    %v462 = vunpack.c.h.b16 %v130
    %v463 = vunpack.c.l.b16 %v131
    %v464 = vunpack.c.h.b16 %v131
    %v465 = vunpack.c.l.b16 %v132
    %v466 = vunpack.c.h.b16 %v132
    %v467 = vunpack.c.l.b16 %v133
    %v468 = vunpack.c.h.b16 %v133
    %v469 = vunpack.c.l.b16 %v134
    %v470 = vunpack.c.h.b16 %v134
    %v471 = vunpack.c.l.b16 %v135
    %v472 = vunpack.c.h.b16 %v135
    %v473 = vunpack.c.l.b16 %v136
    %v474 = vunpack.c.h.b16 %v136
    %v475 = vunpack.c.l.b16 %v137
    %v476 = vunpack.c.h.b16 %v137
    %v477 = vunpack.c.l.b16 %v138
    %v478 = vunpack.c.h.b16 %v138
    %v479 = vunpack.c.l.b16 %v139
    %v480 = vunpack.c.h.b16 %v139
    %v481 = vpack.c.b16 %v287, %v285
    %v482 = vpack.c.b16 %v288, %v286
    %v483 = vpack.c.b16 %v291, %v289
    %v484 = vpack.c.b16 %v292, %v290
    %v485 = vpack.c.b16 %v295, %v293
    %v486 = vpack.c.b16 %v296, %v294
    %v487 = vpack.c.b16 %v299, %v297
    %v488 = vpack.c.b16 %v300, %v298
    %v489 = vpack.c.b16 %v303, %v301
    %v490 = vpack.c.b16 %v304, %v302
    %v491 = vpack.c.b16 %v307, %v305
    %v492 = vpack.c.b16 %v308, %v306
    %v493 = vpack.c.b16 %v311, %v309
    %v494 = vpack.c.b16 %v312, %v310
    %v495 = vpack.c.b16 %v315, %v313
    %v496 = vpack.c.b16 %v316, %v314
    %v497 = vpack.c.b16 %v319, %v317
    %v498 = vpack.c.b16 %v320, %v318
    %v499 = vpack.c.b16 %v323, %v321
    %v500 = vpack.c.b16 %v324, %v322
    %v501 = vpack.c.b16 %v327, %v325
    %v502 = vpack.c.b16 %v328, %v326
    %v503 = vpack.c.b16 %v331, %v329
    %v504 = vpack.c.b16 %v332, %v330
    %v505 = vpack.c.b16 %v335, %v333
    %v506 = vpack.c.b16 %v336, %v334
    %v507 = vpack.c.b16 %v339, %v337
    %v508 = vpack.c.b16 %v340, %v338
    %v509 = vpack.c.b16 %v343, %v341
    %v510 = vpack.c.b16 %v344, %v342
    %v511 = vpack.c.b16 %v347, %v345
    %v512 = vpack.c.b16 %v348, %v346
    %v513 = vpack.c.b16 %v351, %v349
    %v514 = vpack.c.b16 %v352, %v350
    %v515 = vpack.c.b16 %v355, %v353
    %v516 = vpack.c.b16 %v356, %v354
    %v517 = vpack.c.b16 %v359, %v357
    %v518 = vpack.c.b16 %v360, %v358
    %v519 = vpack.c.b16 %v363, %v361
    %v520 = vpack.c.b16 %v364, %v362
    %v521 = vpack.c.b16 %v367, %v365
    %v522 = vpack.c.b16 %v368, %v366
    %v523 = vpack.c.b16 %v371, %v369
    %v524 = vpack.c.b16 %v372, %v370
    %v525 = vpack.c.b16 %v375, %v373
    %v526 = vpack.c.b16 %v376, %v374
    %v527 = vpack.c.b16 %v379, %v377
    %v528 = vpack.c.b16 %v380, %v378
    %v529 = vpack.c.b16 %v383, %v381
    %v530 = vpack.c.b16 %v384, %v382
    %v531 = vpack.c.b16 %v387, %v385
    %v532 = vpack.c.b16 %v388, %v386
    %v533 = vpack.c.b16 %v391, %v389
    %v534 = vpack.c.b16 %v392, %v390
    %v535 = vpack.c.b16 %v395, %v393
    %v536 = vpack.c.b16 %v396, %v394
    %v537 = vpack.c.b16 %v399, %v397
    %v538 = vpack.c.b16 %v400, %v398
    %v539 = vpack.c.b16 %v403, %v401
    %v540 = vpack.c.b16 %v404, %v402
    %v541 = vpack.c.b16 %v407, %v405
    %v542 = vpack.c.b16 %v408, %v406
    %v543 = vpack.c.b16 %v411, %v409
    %v544 = vpack.c.b16 %v412, %v410
    %v545 = vpack.c.b16 %v415, %v413
    %v546 = vpack.c.b16 %v416, %v414
    %v547 = vpack.c.b16 %v419, %v417
    %v548 = vpack.c.b16 %v420, %v418
    %v549 = vpack.c.b16 %v423, %v421
    %v550 = vpack.c.b16 %v424, %v422
    %v551 = vpack.c.b16 %v427, %v425
    %v552 = vpack.c.b16 %v428, %v426
    %v553 = vpack.c.b16 %v431, %v429
    %v554 = vpack.c.b16 %v432, %v430
    %v555 = vpack.c.b16 %v435, %v433
    %v556 = vpack.c.b16 %v436, %v434
    %v557 = vpack.c.b16 %v439, %v437
    %v558 = vpack.c.b16 %v440, %v438
    %v559 = vpack.c.b16 %v443, %v441
    %v560 = vpack.c.b16 %v444, %v442
    %v561 = vpack.c.b16 %v447, %v445
    %v562 = vpack.c.b16 %v448, %v446
    %v563 = vpack.c.b16 %v451, %v449
    %v564 = vpack.c.b16 %v452, %v450
    %v565 = vpack.c.b16 %v455, %v453
    %v566 = vpack.c.b16 %v456, %v454
    %v567 = vpack.c.b16 %v459, %v457
    %v568 = vpack.c.b16 %v460, %v458
    %v569 = vpack.c.b16 %v463, %v461
    %v570 = vpack.c.b16 %v464, %v462
    %v571 = vpack.c.b16 %v467, %v465
    %v572 = vpack.c.b16 %v468, %v466
    %v573 = vpack.c.b16 %v471, %v469
    %v574 = vpack.c.b16 %v472, %v470
    %v575 = vpack.c.b16 %v475, %v473
    %v576 = vpack.c.b16 %v476, %v474
    %v577 = vpack.c.b16 %v479, %v477
    %v578 = vpack.c.b16 %v480, %v478
    %vm677 = vcmask 130048
    %v679 = vsel %vm677, %v180, 0
    %681 = vmatprep.subr.bf16.mxu0 %v482
    %682 = vmatpush1.bf16.msra.mxu0 %v481
    %683 = vmatprep.subr.bf16.mxu0 %v484
    %684 = vmatpush1.bf16.msra.mxu0 %v483
    %685 = vmatprep.subr.bf16.mxu0 %v486
    %686 = vmatpush1.bf16.msra.mxu0 %v485
    %687 = vmatprep.subr.bf16.mxu0 %v488
    %688 = vmatpush1.bf16.msra.mxu0 %v487
    %689 = vmatprep.subr.bf16.mxu0 %v490
    %690 = vmatpush1.bf16.msra.mxu0 %v489
    %691 = vmatprep.subr.bf16.mxu0 %v492
    %692 = vmatpush1.bf16.msra.mxu0 %v491
    %693 = vmatprep.subr.bf16.mxu0 %v494
    %694 = vmatpush1.bf16.msra.mxu0 %v493
    %695 = vmatprep.subr.bf16.mxu0 %v496
    %696 = vmatpush1.bf16.msra.mxu0 %v495
    %697 = vmatprep.subr.bf16.mxu0 %v498
    %698 = vmatpush1.bf16.msra.mxu0 %v497
    %699 = vmatprep.subr.bf16.mxu0 %v500
    %700 = vmatpush1.bf16.msra.mxu0 %v499
    %701 = vmatprep.subr.bf16.mxu0 %v502
    %702 = vmatpush1.bf16.msra.mxu0 %v501
    %703 = vmatprep.subr.bf16.mxu0 %v504
    %704 = vmatpush1.bf16.msra.mxu0 %v503
    %705 = vmatprep.subr.bf16.mxu0 %v506
    %706 = vmatpush1.bf16.msra.mxu0 %v505
    %707 = vmatprep.subr.bf16.mxu0 %v508
    %708 = vmatpush1.bf16.msra.mxu0 %v507
    %709 = vmatprep.subr.bf16.mxu0 %v510
    %710 = vmatpush1.bf16.msra.mxu0 %v509
    %711 = vmatprep.subr.bf16.mxu0 %v512
    %712 = vmatpush1.bf16.msra.mxu0 %v511
    %713 = vmatprep.mubr.bf16.mxu0 %v175
    %714 = vmatmul.mubr.bf16.gmra.mrb[0].mxu0 %v174
    %v715 = vpop.f32.mrb[0].mxu0
    %v716 = vadd.f32 %v145, %v715
    %v717 = vpop.f32.mrb[0].mxu0
    %v718 = vadd.f32 %v149, %v717
    %v719 = vpop.f32.mrb[0].mxu0
    %v720 = vadd.f32 %v145, %v719
    %v721 = vpop.f32.mrb[0].mxu0
    %v722 = vadd.f32 %v149, %v721
    %723 = vdwg.mxu0
    %724 = vmatprep.subr.bf16.mxu0 %v514
    %725 = vmatpush1.bf16.msra.mxu0 %v513
    %726 = vmatprep.subr.bf16.mxu0 %v516
    %727 = vmatpush1.bf16.msra.mxu0 %v515
    %728 = vmatprep.subr.bf16.mxu0 %v518
    %729 = vmatpush1.bf16.msra.mxu0 %v517
    %730 = vmatprep.subr.bf16.mxu0 %v520
    %731 = vmatpush1.bf16.msra.mxu0 %v519
    %732 = vmatprep.subr.bf16.mxu0 %v522
    %733 = vmatpush1.bf16.msra.mxu0 %v521
    %734 = vmatprep.subr.bf16.mxu0 %v524
    %735 = vmatpush1.bf16.msra.mxu0 %v523
    %736 = vmatprep.subr.bf16.mxu0 %v526
    %737 = vmatpush1.bf16.msra.mxu0 %v525
    %738 = vmatprep.subr.bf16.mxu0 %v528
    %739 = vmatpush1.bf16.msra.mxu0 %v527
    %740 = vmatprep.subr.bf16.mxu0 %v530
    %741 = vmatpush1.bf16.msra.mxu0 %v529
    %742 = vmatprep.subr.bf16.mxu0 %v532
    %743 = vmatpush1.bf16.msra.mxu0 %v531
    %744 = vmatprep.subr.bf16.mxu0 %v534
    %745 = vmatpush1.bf16.msra.mxu0 %v533
    %746 = vmatprep.subr.bf16.mxu0 %v536
    %747 = vmatpush1.bf16.msra.mxu0 %v535
    %748 = vmatprep.subr.bf16.mxu0 %v538
    %749 = vmatpush1.bf16.msra.mxu0 %v537
    %750 = vmatprep.subr.bf16.mxu0 %v540
    %751 = vmatpush1.bf16.msra.mxu0 %v539
    %752 = vmatprep.subr.bf16.mxu0 %v542
    %753 = vmatpush1.bf16.msra.mxu0 %v541
    %754 = vmatprep.subr.bf16.mxu0 %v544
    %755 = vmatpush1.bf16.msra.mxu0 %v543
    %756 = vmatprep.mubr.bf16.mxu0 %v177
    %757 = vmatmul.mubr.bf16.gmra.mrb[0].mxu0 %v176
    %v758 = vpop.f32.mrb[0].mxu0
    %v759 = vadd.f32 %v716, %v758
    %v760 = vpop.f32.mrb[0].mxu0
    %v761 = vadd.f32 %v718, %v760
    %v762 = vpop.f32.mrb[0].mxu0
    %v763 = vadd.f32 %v720, %v762
    %v764 = vpop.f32.mrb[0].mxu0
    %v765 = vadd.f32 %v722, %v764
    %766 = vdwg.mxu0
    %767 = vmatprep.subr.bf16.mxu0 %v546
    %768 = vmatpush1.bf16.msra.mxu0 %v545
    %769 = vmatprep.subr.bf16.mxu0 %v548
    %770 = vmatpush1.bf16.msra.mxu0 %v547
    %771 = vmatprep.subr.bf16.mxu0 %v550
    %772 = vmatpush1.bf16.msra.mxu0 %v549
    %773 = vmatprep.subr.bf16.mxu0 %v552
    %774 = vmatpush1.bf16.msra.mxu0 %v551
    %775 = vmatprep.subr.bf16.mxu0 %v554
    %776 = vmatpush1.bf16.msra.mxu0 %v553
    %777 = vmatprep.subr.bf16.mxu0 %v556
    %778 = vmatpush1.bf16.msra.mxu0 %v555
    %779 = vmatprep.subr.bf16.mxu0 %v558
    %780 = vmatpush1.bf16.msra.mxu0 %v557
    %781 = vmatprep.subr.bf16.mxu0 %v560
    %782 = vmatpush1.bf16.msra.mxu0 %v559
    %783 = vmatprep.subr.bf16.mxu0 %v562
    %784 = vmatpush1.bf16.msra.mxu0 %v561
    %785 = vmatprep.subr.bf16.mxu0 %v564
    %786 = vmatpush1.bf16.msra.mxu0 %v563
    %787 = vmatprep.subr.bf16.mxu0 %v566
    %788 = vmatpush1.bf16.msra.mxu0 %v565
    %789 = vmatprep.subr.bf16.mxu0 %v568
    %790 = vmatpush1.bf16.msra.mxu0 %v567
    %791 = vmatprep.subr.bf16.mxu0 %v570
    %792 = vmatpush1.bf16.msra.mxu0 %v569
    %793 = vmatprep.subr.bf16.mxu0 %v572
    %794 = vmatpush1.bf16.msra.mxu0 %v571
    %795 = vmatprep.subr.bf16.mxu0 %v574
    %796 = vmatpush1.bf16.msra.mxu0 %v573
    %797 = vmatprep.subr.bf16.mxu0 %v576
    %798 = vmatpush1.bf16.msra.mxu0 %v575
    %799 = vmatprep.mubr.bf16.mxu0 %v179
    %800 = vmatmul.mubr.bf16.gmra.mrb[0].mxu0 %v178
    %v801 = vpop.f32.mrb[0].mxu0
    %v802 = vadd.f32 %v759, %v801
    %v803 = vpop.f32.mrb[0].mxu0
    %v804 = vadd.f32 %v761, %v803
    %v805 = vpop.f32.mrb[0].mxu0
    %v806 = vadd.f32 %v763, %v805
    %v807 = vpop.f32.mrb[0].mxu0
    %v808 = vadd.f32 %v765, %v807
    %809 = vdwg.mxu0
    %810 = vmatprep.subr.bf16.mxu0 %v578
    %811 = vmatpush1.bf16.msra.mxu0 %v577
    %812 = vmatprep.subr.bf16.mxu0 0
    %813 = vmatpush1.bf16.msra.mxu0 0
    %814 = vmatprep.subr.bf16.mxu0 0
    %815 = vmatpush1.bf16.msra.mxu0 0
    %816 = vmatprep.subr.bf16.mxu0 0
    %817 = vmatpush1.bf16.msra.mxu0 0
    %818 = vmatprep.subr.bf16.mxu0 0
    %819 = vmatpush1.bf16.msra.mxu0 0
    %820 = vmatprep.subr.bf16.mxu0 0
    %821 = vmatpush1.bf16.msra.mxu0 0
    %822 = vmatprep.subr.bf16.mxu0 0
    %823 = vmatpush1.bf16.msra.mxu0 0
    %824 = vmatprep.subr.bf16.mxu0 0
    %825 = vmatpush1.bf16.msra.mxu0 0
    %826 = vmatprep.subr.bf16.mxu0 0
    %827 = vmatpush1.bf16.msra.mxu0 0
    %828 = vmatprep.subr.bf16.mxu0 0
    %829 = vmatpush1.bf16.msra.mxu0 0
    %830 = vmatprep.subr.bf16.mxu0 0
    %831 = vmatpush1.bf16.msra.mxu0 0
    %832 = vmatprep.subr.bf16.mxu0 0
    %833 = vmatpush1.bf16.msra.mxu0 0
    %834 = vmatprep.subr.bf16.mxu0 0
    %835 = vmatpush1.bf16.msra.mxu0 0
    %836 = vmatprep.subr.bf16.mxu0 0
    %837 = vmatpush1.bf16.msra.mxu0 0
    %838 = vmatprep.subr.bf16.mxu0 0
    %839 = vmatpush1.bf16.msra.mxu0 0
    %840 = vmatprep.subr.bf16.mxu0 0
    %841 = vmatpush1.bf16.msra.mxu0 0
    %842 = vmatprep.mubr.bf16.mxu0 0
    %843 = vmatmul.mubr.bf16.gmra.mrb[0].mxu0 %v679
    %v844 = vpop.f32.mrb[0].mxu0
    %v845 = vadd.f32 %v802, %v844
    %v846 = vpop.f32.mrb[0].mxu0
    %v847 = vadd.f32 %v804, %v846
    %v848 = vpop.f32.mrb[0].mxu0
    %v849 = vadd.f32 %v806, %v848
    %v850 = vpop.f32.mrb[0].mxu0
    %v851 = vadd.f32 %v808, %v850
    %852 = vdwg.mxu0
    %v853 = vmul.f32 %v845, 0.02
    %v854 = vmul.f32 %v847, 0.02
    %v855 = vmul.f32 %v849, 0.02
    %v856 = vmul.f32 %v851, 0.02
    %v857 = vmax.f32 %v845, %v853
    %v858 = vmax.f32 %v847, %v854
    %v859 = vmax.f32 %v849, %v855
    %v860 = vmax.f32 %v851, %v856
    %vm861 = vcmask 588800
    %v862 = vsel %vm861, %v858, 0.0
    %v863 = vadd.f32 %v857, %v862
    %864 = vadd.xlane.f32.xlu0 %v863
    %v865 = vpop.xlane.xlu0 %864
    %v866 = vsel %vm861, %v860, 0.0
    %v867 = vadd.f32 %v859, %v866
    %868 = vadd.xlane.f32.xlu0 %v867
    %v869 = vpop.xlane.xlu0 %868
    %v870 = vmul.f32 %v857, %v857
    %v871 = vmul.f32 %v858, %v858
    %v872 = vmul.f32 %v859, %v859
    %v873 = vmul.f32 %v860, %v860
    %v874 = vsel %vm861, %v871, 0.0
    %v875 = vadd.f32 %v870, %v874
    %876 = vadd.xlane.f32.xlu0 %v875
    %v877 = vpop.xlane.xlu0 %876
    %v878 = vsel %vm861, %v873, 0.0
    %v879 = vadd.f32 %v872, %v878
    %880 = vadd.xlane.f32.xlu0 %v879
    %v881 = vpop.xlane.xlu0 %880
    %v882 = vld [vmem:[%s3] sm:$0x3]
    %v884 = vlaneseq
    %v885 = vshrl.u32 %v884, 7
    %v886 = vsub.s32 0, %v885
    %v887 = vrot.slane %v882, %v886
    %v888 = vlaneseq
    %v889 = vshrl.u32 %v888, 7
    %v890 = vsub.s32 1, %v889
    %v891 = vrot.slane %v882, %v890
    %v894 = vmul.f32 %v857, %v887
    %v895 = vmul.f32 %v858, %v891
    %v896 = vmul.f32 %v859, %v887
    %v897 = vmul.f32 %v860, %v891
    %v898 = vsel %vm861, %v895, 0.0
    %v899 = vadd.f32 %v894, %v898
    %900 = vadd.xlane.f32.xlu0 %v899
    %v901 = vpop.xlane.xlu0 %900
    %v902 = vsel %vm861, %v897, 0.0
    %v903 = vadd.f32 %v896, %v902
    %904 = vadd.xlane.f32.xlu0 %v903
    %v905 = vpop.xlane.xlu0 %904
    %v906 = vmul.f32 %v865, 0.005
    %v907 = vmul.f32 %v869, 0.005
    %v908 = vmul.f32 %v877, 0.005
    %v909 = vmul.f32 %v881, 0.005
    %v910 = vmul.f32 %v906, %v906
    %v911 = vmul.f32 %v907, %v907
    %v912 = vsub.f32 %v908, %v910
    %v913 = vsub.f32 %v909, %v911
    %v914 = vmax.f32 %v912, 0.0
    %v915 = vmax.f32 %v913, 0.0
    %v916 = vadd.f32 %v914, 1e-05
    %v917 = vadd.f32 %v915, 1e-05
    %v918 = vrsqrt.pop %v916
    %v919 = vrsqrt.pop %v917
    %s920 = sld [smem:[#allocation2]]
    %v921 = vstv %s920
    %v922 = vmul.f32 %v906, %v921
    %v923 = vmul.f32 %v907, %v921
    %v924 = vsub.f32 %v901, %v922
    %v925 = vsub.f32 %v905, %v923
    %v926 = vmul.f32 %v918, %v924
    %v927 = vmul.f32 %v919, %v925
    %s928 = sld [smem:[#allocation2 + $0x1]]
    %v929 = vstv %s928
    %v930 = vadd.f32 %v926, %v929
    %v931 = vadd.f32 %v927, %v929
    %v932 = vxor.u32 %v930, 2147483648
    %v933 = vxor.u32 %v931, 2147483648
    %v934 = vmul.f32 %v932, 1.442695
    %v935 = vpow.pop %v934
    %v936 = vmul.f32 %v933, 1.442695
    %v937 = vpow.pop %v936
    %v938 = vadd.f32 %v935, 1.0
    %v939 = vadd.f32 %v937, 1.0
    %v940 = vrcp.pop %v938
    %v941 = vmul.f32 1.0, %v940
    %v942 = vrcp.pop %v939
    %v943 = vmul.f32 1.0, %v942
    %vm944 = vcmask 7168
    %945 = vst.msk [vmem:[%s5] sm:$0xff] %vm944, %v941
    %946 = vst.msk [vmem:[%s5 + $0x8] sm:$0xff] %vm944, %v943
    // Predicated region
    $region26: #{tpu_custom_call.1} parent=1 // pred_check
      _
    $region27: #{tpu_custom_call.1} parent=1 // pred_check_branch
      %948 = sbr.rel (0) target = $region29
    $region28: #{tpu_custom_call.1} parent=1 // pred_region
      _
    $region29: #{tpu_custom_call.1} parent=1 // pred_fallthru
      _
    // Predicated region
    $region30: #{tpu_custom_call.1} parent=1 // pred_check
      _
    $region31: #{tpu_custom_call.1} parent=1 // pred_check_branch
      %950 = sbr.rel (0) target = $region33
    $region32: #{tpu_custom_call.1} parent=1 // pred_region
      _
    $region33: #{tpu_custom_call.1} parent=1 // pred_fallthru
      _
    %951 = vsyncpa [#allocation3], 1

</llo_original>
